<compile_context>
chip_gen: v7x
topology: tpu7x:2x2x1
jax: 0.10.0
libtpu: 0.0.40
codegen_flags: <defaults>
</compile_context>

<pallas_src>
import itertools

import numpy as np
import jax
import jax.numpy as jnp
from jax.experimental import pallas as pl
from jax.experimental.pallas import tpu as pltpu


def _round_up(x, m):
    return ((x + m - 1) // m) * m


# ----------------------------------------------------------------------------
# Fused cost-matrix kernel:
#   C = (-w_ce * softmax(logits)) @ onehot^T  +  L1(w_bbox*boxes)  +  w_giou*(-giou)
# Inputs:
#   logits_ref : (TM, C)   raw class logits (row tile)
#   ob_ref     : (TM, 4)   predicted boxes, xyxy, pre-scaled by w_bbox
#   onehot_ref : (C, Tp)   (-w_ce) * one_hot(tgt_cls)^T, fully VMEM-resident
#   tbt_ref    : (4, Tp)   target boxes^T, xyxy, pre-scaled by w_bbox, resident
#   c_ref      : (TM, TN)  output cost tile
# ----------------------------------------------------------------------------
def _make_cost_kernel(w_giou, eps):
    w_giou = float(w_giou)
    eps = float(eps)

    def cost_kernel(logits_ref, ob_ref, onehot_ref, tbt_ref, c_ref):
        tm, tn = c_ref.shape
        j = pl.program_id(1)
        col = pl.multiple_of(j * tn, 128)

        # --- fused softmax over classes (small (TM, C) work; exact divide) ---
        x = logits_ref[...]
        mx = jnp.max(x, axis=-1, keepdims=True)
        e = jnp.exp(x - mx)
        p = e / jnp.sum(e, axis=-1, keepdims=True)

        # --- class cost on the MXU (-w_ce already folded into the one-hot) ---
        oh = onehot_ref[:, pl.ds(col, tn)]                              # (C, TN)
        cls_term = jnp.dot(p, oh, preferred_element_type=jnp.float32)  # (TM, TN)

        ob = ob_ref[...]                                # (TM, 4) xyxy * w_bbox
        tbt = tbt_ref[:, pl.ds(col, tn)]                # (4, TN)  xyxy^T * w_bbox

        # per-row / per-col areas on the narrow shapes (cheap), broadcast once
        area_o = (ob[:, 2:3] - ob[:, 0:1]) * (ob[:, 3:4] - ob[:, 1:2])       # (TM,1)
        area_t = (tbt[2:3, :] - tbt[0:1, :]) * (tbt[3:4, :] - tbt[1:2, :])   # (1,TN)
        sum_area = area_o + area_t                                           # (TM,TN)

        # hoist coordinate broadcasts (each is reused 3x; JAX doesn't CSE them)
        ox1 = jnp.broadcast_to(ob[:, 0:1], (tm, tn))
        oy1 = jnp.broadcast_to(ob[:, 1:2], (tm, tn))
        ox2 = jnp.broadcast_to(ob[:, 2:3], (tm, tn))
        oy2 = jnp.broadcast_to(ob[:, 3:4], (tm, tn))
        tx1 = jnp.broadcast_to(tbt[0:1, :], (tm, tn))
        ty1 = jnp.broadcast_to(tbt[1:2, :], (tm, tn))
        tx2 = jnp.broadcast_to(tbt[2:3, :], (tm, tn))
        ty2 = jnp.broadcast_to(tbt[3:4, :], (tm, tn))

        # --- L1 cost (w_bbox already folded into the coordinates) ---
        l1 = (jnp.abs(ox1 - tx1) + jnp.abs(oy1 - ty1)
              + jnp.abs(ox2 - tx2) + jnp.abs(oy2 - ty2))                 # (TM,TN)

        # --- GIoU cost (scale-invariant -> unaffected by the w_bbox folding) ---
        iw = jnp.maximum(jnp.minimum(ox2, tx2) - jnp.maximum(ox1, tx1), 0.0)
        ih = jnp.maximum(jnp.minimum(oy2, ty2) - jnp.maximum(oy1, ty1), 0.0)
        inter = iw * ih
        union = sum_area - inter
        enc = ((jnp.maximum(ox2, tx2) - jnp.minimum(ox1, tx1))
               * (jnp.maximum(oy2, ty2) - jnp.minimum(oy1, ty1)))
        r_union = pl.reciprocal(union + eps, approx=True)                # EUP slot
        r_enc = pl.reciprocal(enc + eps, approx=True)                    # EUP slot
        # w_giou * cost_giou = w_giou * ((enc - union)/enc - iou)
        giou_term = w_giou * ((enc - union) * r_enc - inter * r_union)

        c_ref[...] = cls_term + l1 + giou_term

    return cost_kernel


def pallas_cost_matrix(out_bbox, out_logits, tgt_bbox, tgt_cls, weights,
                       tm_max=512, tn_max=1024):
    """out_bbox: (N,4) f32, out_logits: (N,C) f32, tgt_bbox: (T,4) f32, tgt_cls: (T,) int."""
    N = out_bbox.shape[0]
    C = out_logits.shape[1]
    T = tgt_bbox.shape[0]
    f32 = jnp.float32

    w_ce = float(weights['ce'])
    w_bbox = float(weights['bbox'])
    w_giou = float(weights['giou'])

    # Tile sizes: multiples of (8, 128).
    TM = min(tm_max, _round_up(N, 8))
    TN = min(tn_max, _round_up(T, 128))
    Np = _round_up(N, TM)
    Tp = _round_up(T, TN)
    # v7x megacore: guarantee >= 2 grid steps along the row axis when the whole
    # problem would otherwise be a single tile (keeps the 2nd TensorCore busy).
    if Np // TM == 1 and Tp // TN == 1 and N >= 16:
        Np = _round_up(N, 16)
        TM = Np // 2

    pad_box = jnp.array([0.0, 0.0, 1.0, 1.0], f32)       # valid dummy box (no NaN)

    # Fold w_bbox into the box coordinates (GIoU is scale-invariant, only the
    # L1 term picks up the factor) -> drops one (TM, TN) multiply per tile.
    ob = out_bbox.astype(f32) * w_bbox
    logits = out_logits.astype(f32)
    if Np > N:
        ob = jnp.concatenate(
            [ob, jnp.tile(pad_box[None, :] * w_bbox, (Np - N, 1))], axis=0)
        logits = jnp.concatenate([logits, jnp.zeros((Np - N, C), f32)], axis=0)

    tb = tgt_bbox.astype(f32) * w_bbox
    onehot = jax.nn.one_hot(tgt_cls, C, dtype=f32) * (-w_ce)            # (T, C)
    if Tp > T:
        tb = jnp.concatenate(
            [tb, jnp.tile(pad_box[None, :] * w_bbox, (Tp - T, 1))], axis=0)
        onehot = jnp.concatenate([onehot, jnp.zeros((Tp - T, C), f32)], axis=0)
    tb_t = jnp.transpose(tb)                             # (4, Tp)
    onehot_t = jnp.transpose(onehot)                     # (C, Tp)

    eps = 1e-7 * w_bbox * w_bbox                         # guard rescaled with coords
    kernel = _make_cost_kernel(w_giou, eps)

    c_full = pl.pallas_call(
        kernel,
        out_shape=jax.ShapeDtypeStruct((Np, Tp), f32),
        grid=(Np // TM, Tp // TN),
        in_specs=[
            pl.BlockSpec((TM, C), lambda i, j: (i, 0)),   # logits (row tile)
            pl.BlockSpec((TM, 4), lambda i, j: (i, 0)),   # pred boxes (row tile)
            pl.BlockSpec((C, Tp), lambda i, j: (0, 0)),   # -w_ce*one-hot^T, resident
            pl.BlockSpec((4, Tp), lambda i, j: (0, 0)),   # tgt boxes^T, resident
        ],
        out_specs=pl.BlockSpec((TM, TN), lambda i, j: (i, j)),
        compiler_params=pltpu.CompilerParams(
            dimension_semantics=("parallel", "parallel"),
            vmem_limit_bytes=48 * 1024 * 1024),
    )(logits, ob, onehot_t, tb_t)

    return c_full[:N, :T]


# ----------------------------------------------------------------------------
# Host-side Hungarian assignment (exact brute force for the small demo sizes).
# TODO(synk): linear_sum_assignment is a sequential combinatorial algorithm with
# no clean Pallas equivalent; solved on host here (use scipy for real sizes).
# ----------------------------------------------------------------------------
def _lsa_bruteforce(cost):
    cost = np.asarray(cost)
    Q, T = cost.shape
    assert Q >= T, "expects at least as many queries as targets"
    best_rows, best_cost = None, np.inf
    cols = np.arange(T)
    for perm in itertools.permutations(range(Q), T):
        c = cost[list(perm), cols].sum()
        if c < best_cost:
            best_cost, best_rows = c, perm
    rows = np.array(best_rows)
    order = np.argsort(rows)
    return rows[order], cols[order]


# ----------------------------------------------------------------------------
# HungarianMatcher (JAX/Pallas version)
# ----------------------------------------------------------------------------
class HungarianMatcher:
    def __init__(self, weights):
        self.weights = weights

    def __call__(self, outputs, targets):
        B, Q = outputs['BBox'].shape[:2]
        out_bbox = outputs['BBox'].reshape(B * Q, -1)[:, :4].astype(jnp.float32)
        out_logits = outputs['Object_class'].reshape(B * Q, -1)
        tgt_ids = jnp.concatenate([t['labels'] for t in targets], axis=0).reshape(-1).astype(jnp.int32)
        tgt_bbox = jnp.concatenate([t['BBox'] for t in targets], axis=0).astype(jnp.float32)

        C = pallas_cost_matrix(out_bbox, out_logits, tgt_bbox, tgt_ids, self.weights)
        C = jax.block_until_ready(C)

        C_np = np.asarray(C).reshape(B, Q, -1)
        sizes = [int(t['BBox'].shape[0]) for t in targets]
        splits = np.split(C_np, np.cumsum(sizes)[:-1], axis=-1)
        indices = [_lsa_bruteforce(splits[i][i]) for i in range(B)]
        return [(np.asarray(i, dtype=np.int64), np.asarray(j, dtype=np.int64)) for i, j in indices], C


# ----------------------------------------------------------------------------
# Pure-numpy reference for the cost matrix (correctness check of the kernel).
# ----------------------------------------------------------------------------
def reference_cost(out_bbox, out_logits, tgt_bbox, tgt_cls, weights):
    out_bbox = np.asarray(out_bbox, np.float32)
    out_logits = np.asarray(out_logits, np.float32)
    tgt_bbox = np.asarray(tgt_bbox, np.float32)
    tgt_cls = np.asarray(tgt_cls, np.int32)

    e = np.exp(out_logits - out_logits.max(-1, keepdims=True))
    probs = e / e.sum(-1, keepdims=True)
    cost_class = -probs[:, tgt_cls]
    cost_bbox = np.abs(out_bbox[:, None, :] - tgt_bbox[None, :, :]).sum(-1)

    o = out_bbox[:, None, :]
    t = tgt_bbox[None, :, :]
    area_o = (o[..., 2] - o[..., 0]) * (o[..., 3] - o[..., 1])
    area_t = (t[..., 2] - t[..., 0]) * (t[..., 3] - t[..., 1])
    inter = (np.clip(np.minimum(o[..., 2], t[..., 2]) - np.maximum(o[..., 0], t[..., 0]), 0, None) *
             np.clip(np.minimum(o[..., 3], t[..., 3]) - np.maximum(o[..., 1], t[..., 1]), 0, None))
    union = area_o + area_t - inter
    iou = inter / union
    enc = ((np.maximum(o[..., 2], t[..., 2]) - np.minimum(o[..., 0], t[..., 0])) *
           (np.maximum(o[..., 3], t[..., 3]) - np.minimum(o[..., 1], t[..., 1])))
    giou = iou - (enc - union) / enc
    cost_giou = -giou

    return (weights['giou'] * cost_giou + weights['bbox'] * cost_bbox
            + weights['ce'] * cost_class).astype(np.float32)


def _random_xyxy(key, n):
    k1, k2, k3, k4 = jax.random.split(key, 4)
    x1 = jax.random.uniform(k1, (n, 1), minval=0.0, maxval=0.5)
    y1 = jax.random.uniform(k2, (n, 1), minval=0.0, maxval=0.5)
    w = jax.random.uniform(k3, (n, 1), minval=0.1, maxval=0.5)
    h = jax.random.uniform(k4, (n, 1), minval=0.1, maxval=0.5)
    return jnp.concatenate([x1, y1, x1 + w, y1 + h], axis=-1).astype(jnp.float32)


if __name__ == "__main__":
    B, Q, NUM_CLASSES = 2, 8, 8
    sizes = [3, 5]                      # number of GT objects per batch element
    key = jax.random.PRNGKey(0)
    keys = jax.random.split(key, 8)

    # Predictions: BBox has 6 features (only the first 4 are used, xyxy), plus class logits.
    pred_xyxy = _random_xyxy(keys[0], B * Q).reshape(B, Q, 4)
    pred_extra = jax.random.normal(keys[1], (B, Q, 2), dtype=jnp.float32)
    outputs = {
        'BBox': jnp.concatenate([pred_xyxy, pred_extra], axis=-1),        # (B, Q, 6)
        'Object_class': jax.random.normal(keys[2], (B, Q, NUM_CLASSES),
                                          dtype=jnp.float32),             # (B, Q, C)
    }

    # Targets: list of per-image dicts with 'labels' (T_i, 1) int and 'BBox' (T_i, 4) xyxy.
    targets = []
    for i, t in enumerate(sizes):
        targets.append({
            'labels': jax.random.randint(keys[3 + i], (t, 1), 0, NUM_CLASSES),
            'BBox': _random_xyxy(keys[5 + i], t),
        })

    weights = {'ce': 1.0, 'bbox': 5.0, 'giou': 2.0}
    matcher = HungarianMatcher(weights)

    indices, C_kernel = matcher(outputs, targets)
    C_kernel = jax.block_until_ready(C_kernel)

    # Verify the Pallas cost matrix against a pure-numpy reference.
    # Softmax is exact now; only the two GIoU reciprocals use the EUP
    # approximation (plus a tiny eps guard the numpy reference lacks).
    out_bbox_flat = np.asarray(outputs['BBox']).reshape(B * Q, -1)[:, :4]
    out_logits_flat = np.asarray(outputs['Object_class']).reshape(B * Q, -1)
    tgt_cls_all = np.concatenate([np.asarray(t['labels']).reshape(-1) for t in targets])
    tgt_bbox_all = np.concatenate([np.asarray(t['BBox']) for t in targets], axis=0)
    C_ref = reference_cost(out_bbox_flat, out_logits_flat, tgt_bbox_all, tgt_cls_all, weights)

    np.testing.assert_allclose(np.asarray(C_kernel), C_ref, rtol=2e-3, atol=2e-2)
    assert len(indices) == B
    for (ri, ci), t in zip(indices, sizes):
        assert ri.shape == (t,) and ci.shape == (t,)
        assert len(set(ri.tolist())) == t  # one-to-one assignment

    print("KERNEL_OK")
</pallas_src>

<mosaic_0001>
module attributes {stable_mosaic.version = 11 : i64} {
  func.func @cost_kernel(%arg0: i32, %arg1: i32, %arg2: memref<8x8xf32, #tpu.memory_space<vmem>>, %arg3: memref<8x4xf32, #tpu.memory_space<vmem>>, %arg4: memref<8x128xf32, #tpu.memory_space<vmem>>, %arg5: memref<4x128xf32, #tpu.memory_space<vmem>>, %arg6: memref<8x128xf32, #tpu.memory_space<vmem>>) attributes {dimension_semantics = [#tpu.dimension_semantics<parallel>, #tpu.dimension_semantics<parallel>], iteration_bounds = array<i64: 2, 1>, scalar_prefetch = 0 : i64, scratch_operands = 0 : i64, tpu.core_type = #tpu.core_type<tc>, window_params = [{transform_indices = @transform_0, window_bounds = array<i64: 8, 8>}, {transform_indices = @transform_1, window_bounds = array<i64: 8, 4>}, {pipeline_mode = #tpu.pipeline_mode<synchronous>, transform_indices = @transform_2, window_bounds = array<i64: 8, 128>}, {pipeline_mode = #tpu.pipeline_mode<synchronous>, transform_indices = @transform_3, window_bounds = array<i64: 4, 128>}, {transform_indices = @transform_4, window_bounds = array<i64: 8, 128>}]} {
    %c128_i32 = arith.constant 128 : i32
    %0 = arith.muli %arg1, %c128_i32 : i32
    %1 = tpu.assume_multiple %0, 128 : i32
    %c0 = arith.constant 0 : index
    %c0_0 = arith.constant 0 : index
    %2 = vector.load %arg2[%c0, %c0_0] : memref<8x8xf32, #tpu.memory_space<vmem>>, vector<8x8xf32>
    %cst = arith.constant dense<0xFF800000> : vector<8xf32>
    %3 = vector.multi_reduction <maximumf>, %2, %cst [1] : vector<8x8xf32> to vector<8xf32>
    %4 = vector.shape_cast %3 : vector<8xf32> to vector<8x1xf32>
    %5 = vector.broadcast %4 : vector<8x1xf32> to vector<8x8xf32>
    %6 = arith.subf %2, %5 : vector<8x8xf32>
    %7 = math.exp %6 : vector<8x8xf32>
    %cst_1 = arith.constant dense<0.000000e+00> : vector<8xf32>
    %8 = vector.multi_reduction <add>, %7, %cst_1 [1] : vector<8x8xf32> to vector<8xf32>
    %9 = vector.shape_cast %8 : vector<8xf32> to vector<8x1xf32>
    %10 = vector.broadcast %9 : vector<8x1xf32> to vector<8x8xf32>
    %11 = arith.divf %7, %10 : vector<8x8xf32>
    %c0_2 = arith.constant 0 : index
    %12 = arith.index_cast %1 : i32 to index
    %13 = vector.load %arg4[%c0_2, %12] : memref<8x128xf32, #tpu.memory_space<vmem>>, vector<8x128xf32>
    %cst_3 = arith.constant dense<0.000000e+00> : vector<8x128xf32>
    %14 = tpu.matmul %11, %13, %cst_3 {dimension_numbers = #tpu.dot_dimension_numbers<[1], [0], [0], [1], [0, 0, 1, 1], [], []>} : vector<8x8xf32>, vector<8x128xf32>, vector<8x128xf32> -> vector<8x128xf32>
    %c0_4 = arith.constant 0 : index
    %c0_5 = arith.constant 0 : index
    %15 = vector.load %arg3[%c0_4, %c0_5] : memref<8x4xf32, #tpu.memory_space<vmem>>, vector<8x4xf32>
    %c0_6 = arith.constant 0 : index
    %16 = arith.index_cast %1 : i32 to index
    %17 = vector.load %arg5[%c0_6, %16] : memref<4x128xf32, #tpu.memory_space<vmem>>, vector<4x128xf32>
    %18 = vector.extract_strided_slice %15 {offsets = [0, 2], sizes = [8, 1], strides = [1, 1]} : vector<8x4xf32> to vector<8x1xf32>
    %19 = vector.extract_strided_slice %15 {offsets = [0, 0], sizes = [8, 1], strides = [1, 1]} : vector<8x4xf32> to vector<8x1xf32>
    %20 = arith.subf %18, %19 : vector<8x1xf32>
    %21 = vector.extract_strided_slice %15 {offsets = [0, 3], sizes = [8, 1], strides = [1, 1]} : vector<8x4xf32> to vector<8x1xf32>
    %22 = vector.extract_strided_slice %15 {offsets = [0, 1], sizes = [8, 1], strides = [1, 1]} : vector<8x4xf32> to vector<8x1xf32>
    %23 = arith.subf %21, %22 : vector<8x1xf32>
    %24 = arith.mulf %20, %23 : vector<8x1xf32>
    %25 = vector.extract_strided_slice %17 {offsets = [2, 0], sizes = [1, 128], strides = [1, 1]} : vector<4x128xf32> to vector<1x128xf32>
    %26 = vector.extract_strided_slice %17 {offsets = [0, 0], sizes = [1, 128], strides = [1, 1]} : vector<4x128xf32> to vector<1x128xf32>
    %27 = arith.subf %25, %26 : vector<1x128xf32>
    %28 = vector.extract_strided_slice %17 {offsets = [3, 0], sizes = [1, 128], strides = [1, 1]} : vector<4x128xf32> to vector<1x128xf32>
    %29 = vector.extract_strided_slice %17 {offsets = [1, 0], sizes = [1, 128], strides = [1, 1]} : vector<4x128xf32> to vector<1x128xf32>
    %30 = arith.subf %28, %29 : vector<1x128xf32>
    %31 = arith.mulf %27, %30 : vector<1x128xf32>
    %32 = vector.broadcast %24 : vector<8x1xf32> to vector<8x128xf32>
    %33 = vector.broadcast %31 : vector<1x128xf32> to vector<8x128xf32>
    %34 = arith.addf %32, %33 : vector<8x128xf32>
    %35 = vector.extract_strided_slice %15 {offsets = [0, 0], sizes = [8, 1], strides = [1, 1]} : vector<8x4xf32> to vector<8x1xf32>
    %36 = vector.shape_cast %35 : vector<8x1xf32> to vector<8x1xf32>
    %37 = vector.broadcast %36 : vector<8x1xf32> to vector<8x128xf32>
    %38 = vector.extract_strided_slice %15 {offsets = [0, 1], sizes = [8, 1], strides = [1, 1]} : vector<8x4xf32> to vector<8x1xf32>
    %39 = vector.shape_cast %38 : vector<8x1xf32> to vector<8x1xf32>
    %40 = vector.broadcast %39 : vector<8x1xf32> to vector<8x128xf32>
    %41 = vector.extract_strided_slice %15 {offsets = [0, 2], sizes = [8, 1], strides = [1, 1]} : vector<8x4xf32> to vector<8x1xf32>
    %42 = vector.shape_cast %41 : vector<8x1xf32> to vector<8x1xf32>
    %43 = vector.broadcast %42 : vector<8x1xf32> to vector<8x128xf32>
    %44 = vector.extract_strided_slice %15 {offsets = [0, 3], sizes = [8, 1], strides = [1, 1]} : vector<8x4xf32> to vector<8x1xf32>
    %45 = vector.shape_cast %44 : vector<8x1xf32> to vector<8x1xf32>
    %46 = vector.broadcast %45 : vector<8x1xf32> to vector<8x128xf32>
    %47 = vector.extract_strided_slice %17 {offsets = [0, 0], sizes = [1, 128], strides = [1, 1]} : vector<4x128xf32> to vector<1x128xf32>
    %48 = vector.shape_cast %47 : vector<1x128xf32> to vector<1x128xf32>
    %49 = vector.broadcast %48 : vector<1x128xf32> to vector<8x128xf32>
    %50 = vector.extract_strided_slice %17 {offsets = [1, 0], sizes = [1, 128], strides = [1, 1]} : vector<4x128xf32> to vector<1x128xf32>
    %51 = vector.shape_cast %50 : vector<1x128xf32> to vector<1x128xf32>
    %52 = vector.broadcast %51 : vector<1x128xf32> to vector<8x128xf32>
    %53 = vector.extract_strided_slice %17 {offsets = [2, 0], sizes = [1, 128], strides = [1, 1]} : vector<4x128xf32> to vector<1x128xf32>
    %54 = vector.shape_cast %53 : vector<1x128xf32> to vector<1x128xf32>
    %55 = vector.broadcast %54 : vector<1x128xf32> to vector<8x128xf32>
    %56 = vector.extract_strided_slice %17 {offsets = [3, 0], sizes = [1, 128], strides = [1, 1]} : vector<4x128xf32> to vector<1x128xf32>
    %57 = vector.shape_cast %56 : vector<1x128xf32> to vector<1x128xf32>
    %58 = vector.broadcast %57 : vector<1x128xf32> to vector<8x128xf32>
    %59 = arith.subf %37, %49 : vector<8x128xf32>
    %60 = math.absf %59 : vector<8x128xf32>
    %61 = arith.subf %40, %52 : vector<8x128xf32>
    %62 = math.absf %61 : vector<8x128xf32>
    %63 = arith.addf %60, %62 : vector<8x128xf32>
    %64 = arith.subf %43, %55 : vector<8x128xf32>
    %65 = math.absf %64 : vector<8x128xf32>
    %66 = arith.addf %63, %65 : vector<8x128xf32>
    %67 = arith.subf %46, %58 : vector<8x128xf32>
    %68 = math.absf %67 : vector<8x128xf32>
    %69 = arith.addf %66, %68 : vector<8x128xf32>
    %70 = arith.minimumf %43, %55 : vector<8x128xf32>
    %71 = arith.maximumf %37, %49 : vector<8x128xf32>
    %72 = arith.subf %70, %71 : vector<8x128xf32>
    %cst_7 = arith.constant 0.000000e+00 : f32
    %73 = vector.broadcast %cst_7 : f32 to vector<8x128xf32>
    %74 = arith.maximumf %72, %73 : vector<8x128xf32>
    %75 = arith.minimumf %46, %58 : vector<8x128xf32>
    %76 = arith.maximumf %40, %52 : vector<8x128xf32>
    %77 = arith.subf %75, %76 : vector<8x128xf32>
    %cst_8 = arith.constant 0.000000e+00 : f32
    %78 = vector.broadcast %cst_8 : f32 to vector<8x128xf32>
    %79 = arith.maximumf %77, %78 : vector<8x128xf32>
    %80 = arith.mulf %74, %79 : vector<8x128xf32>
    %81 = arith.subf %34, %80 : vector<8x128xf32>
    %82 = arith.maximumf %43, %55 : vector<8x128xf32>
    %83 = arith.minimumf %37, %49 : vector<8x128xf32>
    %84 = arith.subf %82, %83 : vector<8x128xf32>
    %85 = arith.maximumf %46, %58 : vector<8x128xf32>
    %86 = arith.minimumf %40, %52 : vector<8x128xf32>
    %87 = arith.subf %85, %86 : vector<8x128xf32>
    %88 = arith.mulf %84, %87 : vector<8x128xf32>
    %cst_9 = arith.constant 2.500000e-06 : f32
    %89 = vector.broadcast %cst_9 : f32 to vector<8x128xf32>
    %90 = arith.addf %81, %89 : vector<8x128xf32>
    %91 = tpu.reciprocal %90 {approx = true} : vector<8x128xf32> -> vector<8x128xf32>
    %cst_10 = arith.constant 2.500000e-06 : f32
    %92 = vector.broadcast %cst_10 : f32 to vector<8x128xf32>
    %93 = arith.addf %88, %92 : vector<8x128xf32>
    %94 = tpu.reciprocal %93 {approx = true} : vector<8x128xf32> -> vector<8x128xf32>
    %95 = arith.subf %88, %81 : vector<8x128xf32>
    %96 = arith.mulf %95, %94 : vector<8x128xf32>
    %97 = arith.mulf %80, %91 : vector<8x128xf32>
    %98 = arith.subf %96, %97 : vector<8x128xf32>
    %cst_11 = arith.constant 2.000000e+00 : f32
    %99 = vector.broadcast %cst_11 : f32 to vector<8x128xf32>
    %100 = arith.mulf %99, %98 : vector<8x128xf32>
    %101 = arith.addf %14, %69 : vector<8x128xf32>
    %102 = arith.addf %101, %100 : vector<8x128xf32>
    %c0_12 = arith.constant 0 : index
    %c0_13 = arith.constant 0 : index
    %103 = vector.load %arg6[%c0_12, %c0_13] : memref<8x128xf32, #tpu.memory_space<vmem>>, vector<8x128xf32>
    tpu.vector_store %arg6[%c0_12, %c0_13], %102 {strides = array<i32>} : memref<8x128xf32, #tpu.memory_space<vmem>>, vector<8x128xf32>,
    return
  }
  func.func @transform_0(%arg0: i32, %arg1: i32) -> (i32, i32) {
    %c0_i32 = arith.constant 0 : i32
    %c0_i32_0 = arith.constant 0 : i32
    return %arg0, %c0_i32 : i32, i32
  }
  func.func @transform_1(%arg0: i32, %arg1: i32) -> (i32, i32) {
    %c0_i32 = arith.constant 0 : i32
    %c0_i32_0 = arith.constant 0 : i32
    return %arg0, %c0_i32 : i32, i32
  }
  func.func @transform_2(%arg0: i32, %arg1: i32) -> (i32, i32) {
    %c0_i32 = arith.constant 0 : i32
    %c0_i32_0 = arith.constant 0 : i32
    %c0_i32_1 = arith.constant 0 : i32
    return %c0_i32, %c0_i32_0 : i32, i32
  }
  func.func @transform_3(%arg0: i32, %arg1: i32) -> (i32, i32) {
    %c0_i32 = arith.constant 0 : i32
    %c0_i32_0 = arith.constant 0 : i32
    %c0_i32_1 = arith.constant 0 : i32
    return %c0_i32, %c0_i32_0 : i32, i32
  }
  func.func @transform_4(%arg0: i32, %arg1: i32) -> (i32, i32) {
    %c0_i32 = arith.constant 0 : i32
    return %arg0, %arg1 : i32, i32
  }
}

</mosaic_0001>

<llo_original>
// kernel: tpu_custom_call.1
$region0: #{tpu_custom_call.1}
  #allocation0 [shape = 'u32[]', space=smem, size = 0x4, offset = 0x4, fixed_abs, tag = 'smem constant byte address 0x4 - core index']
  #allocation1 [shape = 'u32[144,128]{1,0:T(1,128)}', space=vmem, size = 0x12000, scoped, tag = 'internal scratch']
  %s0 = inlined_call_operand.vmem [shape: f32[16,8], index: 0, kind: input, shape index: {}]
  %s1 = inlined_call_operand.vmem [shape: f32[16,4], index: 1, kind: input, shape index: {}]
  %s2 = inlined_call_operand.vmem [shape: f32[8,128], index: 2, kind: input, shape index: {}]
  %s3 = inlined_call_operand.vmem [shape: f32[4,128], index: 3, kind: input, shape index: {}]
  %s4 = inlined_call_operand.hbm [shape: f32[16,128], index: 4, kind: output, shape index: {}]
  %s5 = sld [smem:[#allocation0]]
  $region49: #{tpu_custom_call.1} parent=0
    _
  %s7 = ssub.s32 1, %s5
  %s8 = scalar_select 0, %s7, %s5
  $region1: #{tpu_custom_call.1} parent=0
    #allocation2 [shape = 'u8[8192]{0}', space=vmem, size = 0x2000, scoped, tag = 'output window, operand 0']
    #allocation3 [shape = 's32[2]{0}', space=sflag, size = 0x8, scoped, tag = 'scoped memory for tpu_custom_call.1']
    %9 = vsyncpa [#allocation3], 0
    %s10 = scalar_lea.sflag [#allocation3], 1
    %11 = vsyncpa %s10, 0
    loop: start=0, step=1, limit=4
    $region2: #{tpu_custom_call.1} parent=1 // loop_pre_header
      _
    $region3: #{tpu_custom_call.1} parent=1 // loop_header
      %s13 = sphi 0, %s17
      %p14 = scmp.ge.s32.totalorder %s13, 4
      %s20 = sphi 0, %s32
      %s21 = sphi 0, %s28
      %s22 = sphi 0, %s20
      %s23 = sphi 0, %s21
      %s24 = sphi 0, %s22
      %s25 = sphi 0, %s23
      %s35 = sphi 0, %s37
      %s38 = sphi 0, %s35
      %s39 = sphi 0, %s38
      %s55 = sphi 0, %s39
      %s61 = sphi 0, %s63
      %s64 = sphi 0, %s61
      %s65 = sphi 0, %s64
      %s81 = sphi 0, %s65
      %s85 = sphi 0, %s85
      %s87 = sphi 0, %s85
      %s88 = sphi 0, %s87
      %s102 = sphi 0, %s88
      %s106 = sphi 0, %s106
      %s108 = sphi 0, %s106
      %s109 = sphi 0, %s108
      %s123 = sphi 0, %s109
      %s131 = sphi 0, %s133
      %s134 = sphi 0, %s131
      %s135 = sphi 0, %s134
      %s151 = sphi 0, %s135
    $region4: #{tpu_custom_call.1} parent=1 // loop_header_branch
      %16 = sbr.rel (%p14) target = $region8
    $region5: #{tpu_custom_call.1} parent=1 // loop_body
      %s18 = ssub.s32 %s13, 1
      %s19 = ssub.s32 %s13, 2
      %s26 = sadd.s32 1, %s21
      %p27 = scmp.ge.s32.totalorder %s26, 1
      %s28 = scalar_select %p27, 0, %s26
      %s29 = sadd.s32 1, %s20
      %s30 = scalar_select %p27, %s29, %s20
      %p31 = scmp.ge.s32.totalorder %s30, 2
      %s32 = scalar_select %p31, 0, %s30
      %s33 = ssub.s32 %s20, %s32
      %p34 = scmp.eq.s32.totalorder %s33, 0
      %s36 = sadd.s32 %s35, 1
      %s37 = scalar_select %p34, %s35, %s36
      %p40 = pneg %p34
      %p41 = scmp.eq.s32.totalorder %s13, 1
      %p42 = por %p40, %p41
      %p43 = scmp.ne.s32.totalorder %s35, %s38
      %p44 = scmp.eq.s32.totalorder %s13, 0
      %p45 = por %p43, %p44
      %p46 = scmp.ne.s32.totalorder %s35, %s38
      %p47 = scmp.eq.s32.totalorder %s18, 1
      %p48 = por %p46, %p47
      %p49 = scmp.ne.s32.totalorder %s38, %s39
      %p50 = scmp.eq.s32.totalorder %s18, 0
      %p51 = por %p49, %p50
      %p52 = scmp.ne.s32.totalorder %s38, %s39
      %p53 = scmp.eq.s32.totalorder %s19, 1
      %p54 = por %p52, %p53
      %p56 = scmp.ne.s32.totalorder %s39, %s55
      %p57 = scmp.eq.s32.totalorder %s19, 0
      %p58 = por %p56, %p57
      %s59 = ssub.s32 %s20, %s32
      %p60 = scmp.eq.s32.totalorder %s59, 0
      %s62 = sadd.s32 %s61, 1
      %s63 = scalar_select %p60, %s61, %s62
      %p66 = pneg %p60
      %p67 = scmp.eq.s32.totalorder %s13, 1
      %p68 = por %p66, %p67
      %p69 = scmp.ne.s32.totalorder %s61, %s64
      %p70 = scmp.eq.s32.totalorder %s13, 0
      %p71 = por %p69, %p70
      %p72 = scmp.ne.s32.totalorder %s61, %s64
      %p73 = scmp.eq.s32.totalorder %s18, 1
      %p74 = por %p72, %p73
      %p75 = scmp.ne.s32.totalorder %s64, %s65
      %p76 = scmp.eq.s32.totalorder %s18, 0
      %p77 = por %p75, %p76
      %p78 = scmp.ne.s32.totalorder %s64, %s65
      %p79 = scmp.eq.s32.totalorder %s19, 1
      %p80 = por %p78, %p79
      %p82 = scmp.ne.s32.totalorder %s65, %s81
      %p83 = scmp.eq.s32.totalorder %s19, 0
      %p84 = por %p82, %p83
      %s86 = sadd.s32 %s85, 1
      %p89 = scmp.eq.s32.totalorder %s13, 1
      %p90 = scmp.ne.s32.totalorder %s85, %s87
      %p91 = scmp.eq.s32.totalorder %s13, 0
      %p92 = por %p90, %p91
      %p93 = scmp.ne.s32.totalorder %s85, %s87
      %p94 = scmp.eq.s32.totalorder %s18, 1
      %p95 = por %p93, %p94
      %p96 = scmp.ne.s32.totalorder %s87, %s88
      %p97 = scmp.eq.s32.totalorder %s18, 0
      %p98 = por %p96, %p97
      %p99 = scmp.ne.s32.totalorder %s87, %s88
      %p100 = scmp.eq.s32.totalorder %s19, 1
      %p101 = por %p99, %p100
      %p103 = scmp.ne.s32.totalorder %s88, %s102
      %p104 = scmp.eq.s32.totalorder %s19, 0
      %p105 = por %p103, %p104
      %s107 = sadd.s32 %s106, 1
      %p110 = scmp.eq.s32.totalorder %s13, 1
      %p111 = scmp.ne.s32.totalorder %s106, %s108
      %p112 = scmp.eq.s32.totalorder %s13, 0
      %p113 = por %p111, %p112
      %p114 = scmp.ne.s32.totalorder %s106, %s108
      %p115 = scmp.eq.s32.totalorder %s18, 1
      %p116 = por %p114, %p115
      %p117 = scmp.ne.s32.totalorder %s108, %s109
      %p118 = scmp.eq.s32.totalorder %s18, 0
      %p119 = por %p117, %p118
      %p120 = scmp.ne.s32.totalorder %s108, %s109
      %p121 = scmp.eq.s32.totalorder %s19, 1
      %p122 = por %p120, %p121
      %p124 = scmp.ne.s32.totalorder %s109, %s123
      %p125 = scmp.eq.s32.totalorder %s19, 0
      %p126 = por %p124, %p125
      %s127 = ssub.s32 %s20, %s32
      %s128 = ssub.s32 %s21, %s28
      %s129 = sor.u32 %s127, %s128
      %p130 = scmp.eq.s32.totalorder %s129, 0
      %s132 = sadd.s32 %s131, 1
      %s133 = scalar_select %p130, %s131, %s132
      %p136 = pneg %p130
      %p137 = scmp.eq.s32.totalorder %s13, 1
      %p138 = por %p136, %p137
      %p139 = scmp.ne.s32.totalorder %s131, %s134
      %p140 = scmp.eq.s32.totalorder %s13, 0
      %p141 = por %p139, %p140
      %p142 = scmp.ne.s32.totalorder %s131, %s134
      %p143 = scmp.eq.s32.totalorder %s18, 1
      %p144 = por %p142, %p143
      %p145 = scmp.ne.s32.totalorder %s134, %s135
      %p146 = scmp.eq.s32.totalorder %s18, 0
      %p147 = por %p145, %p146
      %p148 = scmp.ne.s32.totalorder %s134, %s135
      %p149 = scmp.eq.s32.totalorder %s19, 1
      %p150 = por %p148, %p149
      %p152 = scmp.ne.s32.totalorder %s135, %s151
      %p153 = scmp.eq.s32.totalorder %s19, 0
      %p154 = por %p152, %p153
      %p155 = scmp.le.s32.totalorder 1, %s13
      %p156 = scmp.lt.s32.totalorder %s13, 3
      %p157 = pnand %p155, %p156
      %p158 = pneg %p157
      // Predicated region
      $region9: #{tpu_custom_call.1} parent=5 // pred_check
        _
      $region10: #{tpu_custom_call.1} parent=5 // pred_check_branch
        %160 = sbr.rel (%p157) target = $region12
      $region11: #{tpu_custom_call.1} parent=5 // pred_region
        %s161 = ssub.s32 %s13, 1
        // Predicated region
        $region13: #{tpu_custom_call.1} parent=11 // pred_check
          %p162 = pneg %p98
        $region14: #{tpu_custom_call.1} parent=11 // pred_check_branch
          %164 = sbr.rel (%p162) target = $region16
        $region15: #{tpu_custom_call.1} parent=11 // pred_region
          _
        $region16: #{tpu_custom_call.1} parent=11 // pred_fallthru
          _
        // Predicated region
        $region17: #{tpu_custom_call.1} parent=11 // pred_check
          %p165 = pneg %p119
        $region18: #{tpu_custom_call.1} parent=11 // pred_check_branch
          %167 = sbr.rel (%p165) target = $region20
        $region19: #{tpu_custom_call.1} parent=11 // pred_region
          _
        $region20: #{tpu_custom_call.1} parent=11 // pred_fallthru
          _
      $region12: #{tpu_custom_call.1} parent=5 // pred_fallthru
        _
      %p168 = scmp.lt.s32.totalorder %s13, 2
      // Predicated region
      $region21: #{tpu_custom_call.1} parent=5 // pred_check
        %p169 = pneg %p168
      $region22: #{tpu_custom_call.1} parent=5 // pred_check_branch
        %171 = sbr.rel (%p169) target = $region24
      $region23: #{tpu_custom_call.1} parent=5 // pred_region
        // Predicated region
        $region25: #{tpu_custom_call.1} parent=23 // pred_check
          %p172 = pneg %p45
        $region26: #{tpu_custom_call.1} parent=23 // pred_check_branch
          %174 = sbr.rel (%p172) target = $region28
        $region27: #{tpu_custom_call.1} parent=23 // pred_region
          %p175 = scmp.lt.s32.totalorder %s20, 1
          %s176 = scalar_select %p175, %s20, 1
          %s177 = smul.addr %s176, 8
          %s178 = scalar_lea.vmem %s0, %s177
        $region28: #{tpu_custom_call.1} parent=23 // pred_fallthru
          _
        // Predicated region
        $region29: #{tpu_custom_call.1} parent=23 // pred_check
          %p179 = pneg %p71
        $region30: #{tpu_custom_call.1} parent=23 // pred_check_branch
          %181 = sbr.rel (%p179) target = $region32
        $region31: #{tpu_custom_call.1} parent=23 // pred_region
          %p182 = scmp.lt.s32.totalorder %s20, 1
          %s183 = scalar_select %p182, %s20, 1
          %s184 = smul.addr %s183, 8
          %s185 = scalar_lea.vmem %s1, %s184
        $region32: #{tpu_custom_call.1} parent=23 // pred_fallthru
          _
      $region24: #{tpu_custom_call.1} parent=5 // pred_fallthru
        _
      %p186 = scmp.le.s32.totalorder 1, %s13
      %p187 = scmp.lt.s32.totalorder %s13, 3
      %p188 = pnand %p186, %p187
      %p189 = pneg %p188
      // Predicated region
      $region33: #{tpu_custom_call.1} parent=5 // pred_check
        _
      $region34: #{tpu_custom_call.1} parent=5 // pred_check_branch
        %191 = sbr.rel (%p188) target = $region36
      $region35: #{tpu_custom_call.1} parent=5 // pred_region
        %s192 = ssub.s32 %s13, 1
        %p193 = scmp.lt.s32.totalorder %s22, 1
        %s194 = scalar_select %p193, %s22, 1
        %s195 = smul.addr %s194, 8
        %s196 = scalar_lea.vmem %s0, %s195
        %p197 = pneg %p51
        %p198 = pneg %p48
        %p199 = scmp.lt.s32.totalorder %s22, 1
        %s200 = scalar_select %p199, %s22, 1
        %s201 = smul.addr %s200, 8
        %s202 = scalar_lea.vmem %s1, %s201
        %p203 = pneg %p77
        %p204 = pneg %p74
        %p205 = pneg %p98
        %p206 = pneg %p95
        %p207 = pneg %p119
        %p208 = pneg %p116
        %p209 = pneg %p147
        %p210 = pneg %p144
        %s211 = sand.u32 %s134, 1
        %s212 = scalar_lea.sflag [#allocation3], %s211
        %s213 = sand.u32 %s134, 1
        %s214 = smul.addr %s213, 8
        %s215 = scalar_lea.vmem [#allocation2], %s214
        %p216 = scmp.lt.s32.totalorder %s22, 1
        %s217 = scalar_select %p216, %s22, 1
        %s218 = smul.addr %s217, 8
        %s219 = scalar_lea.vmem %s0, %s218
        %p220 = scmp.lt.s32.totalorder %s22, 1
        %s221 = scalar_select %p220, %s22, 1
        %s222 = smul.addr %s221, 8
        %s223 = scalar_lea.vmem %s1, %s222
        %s224 = smul.u32 %s23, 128
        %v225 = vld [vmem:[%s219] sm:$0xff]
        %vm226 = vcmask 64512
        %v227 = vsel %vm226, %v225, -inf
        %228 = vmax.xlane.f32.xlu0 %v227
        %v229 = vpop.xlane.xlu0 %228
        %v230 = vsub.f32 %v225, %v229
        %v231 = vmul.f32 %v230, 1.442695
        %v232 = vpow.pop %v231
        %v233 = vsel %vm226, %v232, 0.0
        %234 = vadd.xlane.f32.xlu0 %v233
        %v235 = vpop.xlane.xlu0 %234
        %v236 = vrcp.pop %v235
        %v237 = vmul.f32 %v232, %v236
        %s238 = sshra.s32 %s224, 7
        %s239 = sand.u32 %s224, 127
        %s240 = scalar_lea.vmem %s2, %s238
        %v241 = vld [vmem:[%s240] sm:$0xff]
        %v242 = vld [vmem:[%s223] sm:$0xff]
        %s243 = scalar_lea.vmem %s3, %s238
        %v244 = vld [vmem:[%s243] sm:$0xf]
        %246 = vrot.lane.b32.xlu0 %v242, 2
        %v247 = vpop.permute.xlu0 %246
        %v249 = vsub.f32 %v242, %v247
        %251 = vrot.lane.b32.xlu0 %v249, 127
        %v252 = vpop.permute.xlu0 %251
        %v254 = vmul.f32 %v249, %v252
        %v256 = vrot.slane %v244, 6
        %v258 = vsub.f32 %v244, %v256
        %v260 = vrot.slane %v258, 1
        %v262 = vmul.f32 %v258, %v260
        %264 = vset.pattern.permute.xlu0 2
        %265 = vperm.xlu0 %264, %v254
        %v266 = vpop.permute.xlu0 %265
        %v268 = vlaneseq
        %v269 = vshrl.u32 %v268, 7
        %v270 = vsub.s32 2, %v269
        %v271 = vrot.slane %v262, %v270
        %v272 = vadd.f32 %v266, %v271
        %273 = vset.pattern.permute.xlu0 0
        %274 = vperm.xlu0 %273, %v242
        %v275 = vpop.permute.xlu0 %274
        %277 = vset.pattern.permute.xlu0 1
        %278 = vperm.xlu0 %277, %v242
        %v279 = vpop.permute.xlu0 %278
        %281 = vset.pattern.permute.xlu0 2
        %282 = vperm.xlu0 %281, %v242
        %v283 = vpop.permute.xlu0 %282
        %285 = vset.pattern.permute.xlu0 3
        %286 = vperm.xlu0 %285, %v242
        %v287 = vpop.permute.xlu0 %286
        %v289 = vlaneseq
        %v290 = vshrl.u32 %v289, 7
        %v291 = vsub.s32 0, %v290
        %v292 = vrot.slane %v244, %v291
        %v293 = vlaneseq
        %v294 = vshrl.u32 %v293, 7
        %v295 = vsub.s32 1, %v294
        %v296 = vrot.slane %v244, %v295
        %v297 = vlaneseq
        %v298 = vshrl.u32 %v297, 7
        %v299 = vsub.s32 2, %v298
        %v300 = vrot.slane %v244, %v299
        %v301 = vlaneseq
        %v302 = vshrl.u32 %v301, 7
        %v303 = vsub.s32 3, %v302
        %v304 = vrot.slane %v244, %v303
        %v305 = vsub.f32 %v275, %v292
        %v306 = vand.u32 2147483647, %v305
        %v307 = vsub.f32 %v279, %v296
        %v308 = vand.u32 2147483647, %v307
        %v309 = vadd.f32 %v306, %v308
        %v310 = vsub.f32 %v283, %v300
        %v311 = vand.u32 2147483647, %v310
        %v312 = vadd.f32 %v309, %v311
        %v313 = vsub.f32 %v287, %v304
        %v314 = vand.u32 2147483647, %v313
        %v315 = vadd.f32 %v312, %v314
        %v316 = vmin.f32 %v283, %v300
        %v317 = vmax.f32 %v275, %v292
        %v318 = vsub.f32 %v316, %v317
        %v319 = vmax.f32 %v318, 0.0
        %v320 = vmin.f32 %v287, %v304
        %v321 = vmax.f32 %v279, %v296
        %v322 = vsub.f32 %v320, %v321
        %v323 = vmax.f32 %v322, 0.0
        %v324 = vmul.f32 %v319, %v323
        %v325 = vsub.f32 %v272, %v324
        %v326 = vmax.f32 %v283, %v300
        %v327 = vmin.f32 %v275, %v292
        %v328 = vsub.f32 %v326, %v327
        %v329 = vmax.f32 %v287, %v304
        %v330 = vmin.f32 %v279, %v296
        %v331 = vsub.f32 %v329, %v330
        %v332 = vmul.f32 %v328, %v331
        %v333 = vadd.f32 %v325, 2.5e-06
        %v334 = vrcp.pop %v333
        %v335 = vadd.f32 %v332, 2.5e-06
        %v336 = vrcp.pop %v335
        %v337 = vsub.f32 %v332, %v325
        %v338 = vmul.f32 %v337, %v336
        %v339 = vmul.f32 %v324, %v334
        %v340 = vsub.f32 %v338, %v339
        %v341 = vmul.f32 %v340, 2.0
        %v343 = vsel %vm226, %v237, 0
        %345 = vmatprep.subr.mxu0 0.0
        %346 = vmatpush1.msra.mxu0 %v241
        %347 = vmatprep.subr.mxu0 0.0
        %348 = vmatpush1.msra.mxu0 0.0
        %349 = vmatprep.subr.mxu0 0.0
        %350 = vmatpush1.msra.mxu0 0.0
        %351 = vmatprep.subr.mxu0 0.0
        %352 = vmatpush1.msra.mxu0 0.0
        %353 = vmatprep.subr.mxu0 0.0
        %354 = vmatpush1.msra.mxu0 0.0
        %355 = vmatprep.subr.mxu0 0.0
        %356 = vmatpush1.msra.mxu0 0.0
        %357 = vmatprep.subr.mxu0 0.0
        %358 = vmatpush1.msra.mxu0 0.0
        %359 = vmatprep.subr.mxu0 0.0
        %360 = vmatpush1.msra.mxu0 0.0
        %361 = vmatprep.subr.mxu0 0.0
        %362 = vmatpush1.msra.mxu0 0.0
        %363 = vmatprep.subr.mxu0 0.0
        %364 = vmatpush1.msra.mxu0 0.0
        %365 = vmatprep.subr.mxu0 0.0
        %366 = vmatpush1.msra.mxu0 0.0
        %367 = vmatprep.subr.mxu0 0.0
        %368 = vmatpush1.msra.mxu0 0.0
        %369 = vmatprep.subr.mxu0 0.0
        %370 = vmatpush1.msra.mxu0 0.0
        %371 = vmatprep.subr.mxu0 0.0
        %372 = vmatpush1.msra.mxu0 0.0
        %373 = vmatprep.subr.mxu0 0.0
        %374 = vmatpush1.msra.mxu0 0.0
        %375 = vmatprep.subr.mxu0 0.0
        %376 = vmatpush1.msra.mxu0 0.0
        %377 = vmatprep.subr.mxu0 0.0
        %378 = vmatpush1.msra.mxu0 0.0
        %379 = vmatprep.subr.mxu0 0.0
        %380 = vmatpush1.msra.mxu0 0.0
        %381 = vmatprep.subr.mxu0 0.0
        %382 = vmatpush1.msra.mxu0 0.0
        %383 = vmatprep.subr.mxu0 0.0
        %384 = vmatpush1.msra.mxu0 0.0
        %385 = vmatprep.subr.mxu0 0.0
        %386 = vmatpush1.msra.mxu0 0.0
        %387 = vmatprep.subr.mxu0 0.0
        %388 = vmatpush1.msra.mxu0 0.0
        %389 = vmatprep.subr.mxu0 0.0
        %390 = vmatpush1.msra.mxu0 0.0
        %391 = vmatprep.subr.mxu0 0.0
        %392 = vmatpush1.msra.mxu0 0.0
        %393 = vmatprep.subr.mxu0 0.0
        %394 = vmatpush1.msra.mxu0 0.0
        %395 = vmatprep.subr.mxu0 0.0
        %396 = vmatpush1.msra.mxu0 0.0
        %397 = vmatprep.subr.mxu0 0.0
        %398 = vmatpush1.msra.mxu0 0.0
        %399 = vmatprep.subr.mxu0 0.0
        %400 = vmatpush1.msra.mxu0 0.0
        %401 = vmatprep.subr.mxu0 0.0
        %402 = vmatpush1.msra.mxu0 0.0
        %403 = vmatprep.subr.mxu0 0.0
        %404 = vmatpush1.msra.mxu0 0.0
        %405 = vmatprep.subr.mxu0 0.0
        %406 = vmatpush1.msra.mxu0 0.0
        %407 = vmatprep.subr.mxu0 0.0
        %408 = vmatpush1.msra.mxu0 0.0
        %409 = vmatprep.mubr.f32.mxu0 0.0
        %410 = vmatmul.mubr.f32.gmra.mrb[0].mxu0 %v343
        %v411 = vpop.f32.mrb[0].mxu0
        %v412 = vadd.f32 %v315, %v411
        %v413 = vpop.f32.mrb[0].mxu0
        %414 = vdwg.mxu0
        %v415 = vadd.f32 %v412, %v341
        %416 = vst [vmem:[%s215] sm:$0xff] %v415
        %s417 = sand.u32 %s134, 1
        %s418 = scalar_lea.sflag [#allocation3], %s417
        %s419 = sand.u32 %s134, 1
        %s420 = smul.addr %s419, 8
        %s421 = scalar_lea.vmem [#allocation2], %s420
        // Predicated region
        $region37: #{tpu_custom_call.1} parent=35 // pred_check
          %p422 = pneg %p144
        $region38: #{tpu_custom_call.1} parent=35 // pred_check_branch
          %424 = sbr.rel (%p422) target = $region40
        $region39: #{tpu_custom_call.1} parent=35 // pred_region
          %s426 = ssub.s32 128, 128
          %427 = vsyncadd %s418, %s426
          %s428 = sadd.s32 %s23, %s22
          %s429 = smul.addr %s428, 128
          %s430 = scalar_lea.hbm %s4, %s429
          %s432 = sshll.u32 %s421, 4
          %s433 = int_to_ptr.vmem [resolvable:$true] %s432
          %435 = dma.vmem_to_hbm [thread:$0]  %s433, 128, %s430, %s418
        $region40: #{tpu_custom_call.1} parent=35 // pred_fallthru
          _
      $region36: #{tpu_custom_call.1} parent=5 // pred_fallthru
        _
      %p436 = scmp.le.s32.totalorder 2, %s13
      // Predicated region
      $region41: #{tpu_custom_call.1} parent=5 // pred_check
        %p437 = pneg %p436
      $region42: #{tpu_custom_call.1} parent=5 // pred_check_branch
        %439 = sbr.rel (%p437) target = $region44
      $region43: #{tpu_custom_call.1} parent=5 // pred_region
        %s440 = ssub.s32 %s13, 2
        // Predicated region
        $region45: #{tpu_custom_call.1} parent=43 // pred_check
          %p441 = pneg %p150
        $region46: #{tpu_custom_call.1} parent=43 // pred_check_branch
          %443 = sbr.rel (%p441) target = $region48
        $region47: #{tpu_custom_call.1} parent=43 // pred_region
          %s444 = sand.u32 %s135, 1
          %s445 = scalar_lea.sflag [#allocation3], %s444
          %s446 = sand.u32 %s135, 1
          %s447 = smul.addr %s446, 8
          %s448 = scalar_lea.vmem [#allocation2], %s447
          %449 = dma.done %s445, 128
        $region48: #{tpu_custom_call.1} parent=43 // pred_fallthru
          _
      $region44: #{tpu_custom_call.1} parent=5 // pred_fallthru
        _
    $region6: #{tpu_custom_call.1} parent=1 // loop_footer
      %s17 = sadd.s32 1, %s13
    $region7: #{tpu_custom_call.1} parent=1 // loop_footer_branch
      %12 = sbr.rel target = $region3
    $region8: #{tpu_custom_call.1} parent=1 // loop_exit
      _
    %450 = vsyncpa [#allocation3], 1
    %s451 = scalar_lea.sflag [#allocation3], 1
    %452 = vsyncpa %s451, 1

</llo_original>
